<compile_context>
chip_gen: v6e
topology: v6e:2x2x1
jax: 0.10.0
libtpu: 0.0.40
codegen_flags: <defaults>
</compile_context>

<pallas_src>
import jax
import jax.numpy as jnp
from jax.experimental import pallas as pl
from jax.experimental.pallas import tpu as pltpu

# ------------------------- model hyper-parameters ---------------------------
B = 2          # batch
V = 64         # vocab size (rec.items_num)
E = 32         # embedding size (rec.emb_dim)
L = 16         # max sequence length (rec.max_len)
MAX_NORM = 1.0  # rec.max_emb_norm
EPS = 1e-12    # F.normalize eps


# ------------------------------ Pallas kernel -------------------------------
def weighted_pool_kernel(ids_ref, table_ref, wseq_ref, w1_ref, b1_ref,
                         w2_ref, b2_ref, o_ref):
    # ids_ref  : (B, L)    int32 token ids
    # table_ref: (V, E)    embedding table (row 0 = padding, all zeros)
    # wseq_ref : (1, 1, L) linspace(0.1, 1.0, L) positional weights
    # w1_ref   : (E, E)    sfc1 weight, transposed from torch (out,in)
    # b1_ref   : (1, E)    sfc1 bias
    # w2_ref   : (E, E)    sfc2 weight, transposed from torch (out,in)
    # b2_ref   : (1, E)    sfc2 bias
    # o_ref    : (B, E)    output
    ids = ids_ref[...]                                       # (B, L) i32

    # --- fused gather: weighted one-hot "scatter" matrix on the VPU, so the
    # lookup + weighted pooling collapse into one (B,V)@(V,E) MXU matmul.
    iota_v = jax.lax.broadcasted_iota(jnp.int32, (B, V, L), 1)
    onehot = (ids[:, None, :] == iota_v).astype(jnp.float32)  # (B, V, L)
    pool_mat = jnp.sum(onehot * wseq_ref[...], axis=-1)       # (B, V)

    # --- torch max_norm renorm: scale vocab rows whose L2 norm > MAX_NORM.
    # padding row 0 is all zeros -> scale 1 via the where.
    tbl = table_ref[...]                                      # (V, E)
    row_nrm = jnp.sqrt(jnp.sum(tbl * tbl, axis=-1, keepdims=True))
    scale = jnp.where(row_nrm > MAX_NORM,
                      MAX_NORM / jnp.maximum(row_nrm, 1e-7),
                      1.0)
    tbl_rn = tbl * scale                                      # (V, E)

    # Weighted sequence pooling == matmul(linspace_weights, gathered_emb).
    pooled = jnp.dot(pool_mat, tbl_rn,
                     preferred_element_type=jnp.float32)      # (B, E)

    # --- F.normalize(p=2, dim=-1): x / max(||x||_2, eps)
    nrm = jnp.sqrt(jnp.sum(pooled * pooled, axis=-1, keepdims=True))
    z = pooled / jnp.maximum(nrm, EPS)

    # --- sfc1 -> tanh -> sfc2 -> tanh  (MXU matmuls, f32 accumulation)
    h = jnp.tanh(jnp.dot(z, w1_ref[...],
                         preferred_element_type=jnp.float32) + b1_ref[...])
    y = jnp.tanh(jnp.dot(h, w2_ref[...],
                         preferred_element_type=jnp.float32) + b2_ref[...])
    o_ref[...] = y.astype(o_ref.dtype)


# --------------------------------- wrapper -----------------------------------
def weighted_pool_forward(token_ids, params):
    """Full forward pass, fully fused in one Pallas kernel (lookup + renorm +
    weighted pooling + L2 normalize + sfc1/tanh + sfc2/tanh)."""
    w_seq = params["w_seq"].reshape(1, 1, L)                  # (1, 1, L)
    b1 = params["sfc1_b"].reshape(1, E)                       # (1, E)
    b2 = params["sfc2_b"].reshape(1, E)                       # (1, E)

    # Single grid step: all operands (a few KB total) live in VMEM, one
    # invocation covers the full batch.  If B ever grows large, reintroduce a
    # batch grid with dimension_semantics=("parallel",) to use v7x's second
    # TensorCore.
    vmem = pl.BlockSpec(memory_space=pltpu.MemorySpace.VMEM)
    out = pl.pallas_call(
        weighted_pool_kernel,
        out_shape=jax.ShapeDtypeStruct((B, E), jnp.float32),
        in_specs=[vmem] * 7,
        out_specs=vmem,
    )(token_ids, params["embed"], w_seq,
      params["sfc1_w"], b1, params["sfc2_w"], b2)
    return out


# -------------------------- pure-JAX reference ------------------------------
def lookup_embeddings(table, token_ids):
    """Embedding lookup with torch-style max_norm renorm at lookup time."""
    rows = table[token_ids]                                   # (B, L, E)
    norms = jnp.linalg.norm(rows, axis=-1, keepdims=True)
    scale = MAX_NORM / jnp.maximum(norms, 1e-7)
    return jnp.where(norms > MAX_NORM, rows * scale, rows)


def weighted_pool_reference(token_ids, params):
    emb = lookup_embeddings(params["embed"], token_ids)       # (B, L, E)
    pooled = jnp.einsum("l,ble->be", params["w_seq"], emb)
    nrm = jnp.linalg.norm(pooled, axis=-1, keepdims=True)
    z = pooled / jnp.maximum(nrm, EPS)
    h = jnp.tanh(z @ params["sfc1_w"] + params["sfc1_b"])
    return jnp.tanh(h @ params["sfc2_w"] + params["sfc2_b"])


# ------------------------------- param init ---------------------------------
def init_params(key):
    k1, k2, k3, k4, k5 = jax.random.split(key, 5)
    embed = 0.5 * jax.random.normal(k1, (V, E), dtype=jnp.float32)
    embed = embed.at[0].set(0.0)                              # padding_idx=0
    w_seq = jnp.linspace(0.1, 1.0, L, dtype=jnp.float32)      # self.weight

    lim = 1.0 / (E ** 0.5)                                    # torch Linear init
    sfc1_w = jax.random.uniform(k2, (E, E), jnp.float32, -lim, lim)
    sfc1_b = jax.random.uniform(k3, (E,), jnp.float32, -lim, lim)
    sfc2_w = jax.random.uniform(k4, (E, E), jnp.float32, -lim, lim)
    sfc2_b = jax.random.uniform(k5, (E,), jnp.float32, -lim, lim)
    return dict(embed=embed, w_seq=w_seq,
                sfc1_w=sfc1_w, sfc1_b=sfc1_b,
                sfc2_w=sfc2_w, sfc2_b=sfc2_b)


# ----------------------------------- main ------------------------------------
if __name__ == "__main__":
    key = jax.random.PRNGKey(0)
    kp, kx = jax.random.split(key)
    params = init_params(kp)
    token_ids = jax.random.randint(kx, (B, L), 0, V, dtype=jnp.int32)

    out = jax.block_until_ready(weighted_pool_forward(token_ids, params))
    ref = jax.block_until_ready(weighted_pool_reference(token_ids, params))

    assert out.shape == (B, E)
    assert jnp.allclose(out, ref, atol=1e-3, rtol=1e-3), (
        f"max abs err {jnp.max(jnp.abs(out - ref))}")
    print("KERNEL_OK")
</pallas_src>

<mosaic_0001>
module attributes {stable_mosaic.version = 11 : i64} {
  func.func @weighted_pool_kernel(%arg0: memref<2x16xi32, #tpu.memory_space<vmem>>, %arg1: memref<64x32xf32, #tpu.memory_space<vmem>>, %arg2: memref<1x1x16xf32, #tpu.memory_space<vmem>>, %arg3: memref<32x32xf32, #tpu.memory_space<vmem>>, %arg4: memref<1x32xf32, #tpu.memory_space<vmem>>, %arg5: memref<32x32xf32, #tpu.memory_space<vmem>>, %arg6: memref<1x32xf32, #tpu.memory_space<vmem>>, %arg7: memref<2x32xf32, #tpu.memory_space<vmem>>) attributes {dimension_semantics = [], scalar_prefetch = 0 : i64, scratch_operands = 0 : i64, tpu.core_type = #tpu.core_type<tc>} {
    %c0 = arith.constant 0 : index
    %c0_0 = arith.constant 0 : index
    %0 = vector.load %arg0[%c0, %c0_0] : memref<2x16xi32, #tpu.memory_space<vmem>>, vector<2x16xi32>
    %1 = tpu.iota {dimensions = array<i32: 1>} : vector<2x64x16xi32>
    %2 = vector.shape_cast %0 : vector<2x16xi32> to vector<2x1x16xi32>
    %3 = vector.broadcast %2 : vector<2x1x16xi32> to vector<2x64x16xi32>
    %4 = arith.cmpi eq, %3, %1 : vector<2x64x16xi32>
    %5 = arith.extui %4 : vector<2x64x16xi1> to vector<2x64x16xi32>
    %6 = arith.sitofp %5 : vector<2x64x16xi32> to vector<2x64x16xf32>
    %c0_1 = arith.constant 0 : index
    %c0_2 = arith.constant 0 : index
    %c0_3 = arith.constant 0 : index
    %7 = vector.load %arg2[%c0_1, %c0_2, %c0_3] : memref<1x1x16xf32, #tpu.memory_space<vmem>>, vector<1x1x16xf32>
    %8 = vector.broadcast %7 : vector<1x1x16xf32> to vector<2x64x16xf32>
    %9 = arith.mulf %6, %8 : vector<2x64x16xf32>
    %cst = arith.constant dense<0.000000e+00> : vector<2x64xf32>
    %10 = vector.multi_reduction <add>, %9, %cst [2] : vector<2x64x16xf32> to vector<2x64xf32>
    %c0_4 = arith.constant 0 : index
    %c0_5 = arith.constant 0 : index
    %11 = vector.load %arg1[%c0_4, %c0_5] : memref<64x32xf32, #tpu.memory_space<vmem>>, vector<64x32xf32>
    %12 = arith.mulf %11, %11 : vector<64x32xf32>
    %cst_6 = arith.constant dense<0.000000e+00> : vector<64xf32>
    %13 = vector.multi_reduction <add>, %12, %cst_6 [1] : vector<64x32xf32> to vector<64xf32>
    %14 = vector.shape_cast %13 : vector<64xf32> to vector<64x1xf32>
    %15 = math.sqrt %14 : vector<64x1xf32>
    %cst_7 = arith.constant 1.000000e+00 : f32
    %16 = vector.broadcast %cst_7 : f32 to vector<64x1xf32>
    %17 = arith.cmpf ogt, %15, %16 : vector<64x1xf32>
    %cst_8 = arith.constant 1.000000e-07 : f32
    %18 = vector.broadcast %cst_8 : f32 to vector<64x1xf32>
    %19 = arith.maximumf %15, %18 : vector<64x1xf32>
    %cst_9 = arith.constant 1.000000e+00 : f32
    %20 = vector.broadcast %cst_9 : f32 to vector<64x1xf32>
    %21 = arith.divf %20, %19 : vector<64x1xf32>
    %cst_10 = arith.constant 1.000000e+00 : f32
    %22 = vector.broadcast %cst_10 : f32 to vector<64x1xf32>
    %23 = arith.select %17, %21, %22 : vector<64x1xi1>, vector<64x1xf32>
    %24 = vector.broadcast %23 : vector<64x1xf32> to vector<64x32xf32>
    %25 = arith.mulf %11, %24 : vector<64x32xf32>
    %cst_11 = arith.constant dense<0.000000e+00> : vector<2x32xf32>
    %26 = tpu.matmul %10, %25, %cst_11 {dimension_numbers = #tpu.dot_dimension_numbers<[1], [0], [0], [1], [0, 0, 1, 1], [], []>} : vector<2x64xf32>, vector<64x32xf32>, vector<2x32xf32> -> vector<2x32xf32>
    %27 = arith.mulf %26, %26 : vector<2x32xf32>
    %cst_12 = arith.constant dense<0.000000e+00> : vector<2xf32>
    %28 = vector.multi_reduction <add>, %27, %cst_12 [1] : vector<2x32xf32> to vector<2xf32>
    %29 = vector.shape_cast %28 : vector<2xf32> to vector<2x1xf32>
    %30 = math.sqrt %29 : vector<2x1xf32>
    %cst_13 = arith.constant 9.99999996E-13 : f32
    %31 = vector.broadcast %cst_13 : f32 to vector<2x1xf32>
    %32 = arith.maximumf %30, %31 : vector<2x1xf32>
    %33 = vector.broadcast %32 : vector<2x1xf32> to vector<2x32xf32>
    %34 = arith.divf %26, %33 : vector<2x32xf32>
    %c0_14 = arith.constant 0 : index
    %c0_15 = arith.constant 0 : index
    %35 = vector.load %arg3[%c0_14, %c0_15] : memref<32x32xf32, #tpu.memory_space<vmem>>, vector<32x32xf32>
    %cst_16 = arith.constant dense<0.000000e+00> : vector<2x32xf32>
    %36 = tpu.matmul %34, %35, %cst_16 {dimension_numbers = #tpu.dot_dimension_numbers<[1], [0], [0], [1], [0, 0, 1, 1], [], []>} : vector<2x32xf32>, vector<32x32xf32>, vector<2x32xf32> -> vector<2x32xf32>
    %c0_17 = arith.constant 0 : index
    %c0_18 = arith.constant 0 : index
    %37 = vector.load %arg4[%c0_17, %c0_18] : memref<1x32xf32, #tpu.memory_space<vmem>>, vector<1x32xf32>
    %38 = vector.broadcast %37 : vector<1x32xf32> to vector<2x32xf32>
    %39 = arith.addf %36, %38 : vector<2x32xf32>
    %40 = math.tanh %39 : vector<2x32xf32>
    %c0_19 = arith.constant 0 : index
    %c0_20 = arith.constant 0 : index
    %41 = vector.load %arg5[%c0_19, %c0_20] : memref<32x32xf32, #tpu.memory_space<vmem>>, vector<32x32xf32>
    %cst_21 = arith.constant dense<0.000000e+00> : vector<2x32xf32>
    %42 = tpu.matmul %40, %41, %cst_21 {dimension_numbers = #tpu.dot_dimension_numbers<[1], [0], [0], [1], [0, 0, 1, 1], [], []>} : vector<2x32xf32>, vector<32x32xf32>, vector<2x32xf32> -> vector<2x32xf32>
    %c0_22 = arith.constant 0 : index
    %c0_23 = arith.constant 0 : index
    %43 = vector.load %arg6[%c0_22, %c0_23] : memref<1x32xf32, #tpu.memory_space<vmem>>, vector<1x32xf32>
    %44 = vector.broadcast %43 : vector<1x32xf32> to vector<2x32xf32>
    %45 = arith.addf %42, %44 : vector<2x32xf32>
    %46 = math.tanh %45 : vector<2x32xf32>
    %c0_24 = arith.constant 0 : index
    %c0_25 = arith.constant 0 : index
    %47 = vector.load %arg7[%c0_24, %c0_25] : memref<2x32xf32, #tpu.memory_space<vmem>>, vector<2x32xf32>
    tpu.vector_store %arg7[%c0_24, %c0_25], %46 {strides = array<i32>} : memref<2x32xf32, #tpu.memory_space<vmem>>, vector<2x32xf32>,
    return
  }
}

</mosaic_0001>

<llo_original>
// kernel: tpu_custom_call.1
$region0: #{tpu_custom_call.1}
  #allocation0 [shape = 'u32[]', space=smem, size = 0x4, offset = 0x4, fixed_abs, tag = 'smem constant byte address 0x4 - core index']
  #allocation1 [shape = 'u32[144,128]{1,0:T(1,128)}', space=vmem, size = 0x12000, scoped, tag = 'internal scratch']
  %s0 = inlined_call_operand.vmem [shape: s32[2,16], index: 0, kind: input, shape index: {}]
  %s1 = inlined_call_operand.vmem [shape: f32[64,32], index: 1, kind: input, shape index: {}]
  %s2 = inlined_call_operand.vmem [shape: f32[1,1,16], index: 2, kind: input, shape index: {}]
  %s3 = inlined_call_operand.vmem [shape: f32[32,32], index: 3, kind: input, shape index: {}]
  %s4 = inlined_call_operand.vmem [shape: f32[1,32], index: 4, kind: input, shape index: {}]
  %s5 = inlined_call_operand.vmem [shape: f32[32,32], index: 5, kind: input, shape index: {}]
  %s6 = inlined_call_operand.vmem [shape: f32[1,32], index: 6, kind: input, shape index: {}]
  %s7 = inlined_call_operand.hbm [shape: f32[2,32], index: 7, kind: output, shape index: {}]
  %s8 = sld [smem:[#allocation0]]
  $region38: #{tpu_custom_call.1} parent=0
    _
  %s10 = ssub.s32 1, %s8
  %s11 = scalar_select 0, %s10, %s8
  $region1: #{tpu_custom_call.1} parent=0
    #allocation2 [shape = 'u8[1024]{0}', space=vmem, size = 0x400, scoped, tag = 'output window, operand 0, single buffered']
    #allocation3 [shape = 's32[1]{0}', space=sflag, size = 0x4, scoped, tag = 'scoped memory for tpu_custom_call.1']
    %12 = vsyncpa [#allocation3], 0
    // Predicated region
    $region2: #{tpu_custom_call.1} parent=1 // pred_check
      _
    $region3: #{tpu_custom_call.1} parent=1 // pred_check_branch
      %14 = sbr.rel (0) target = $region5
    $region4: #{tpu_custom_call.1} parent=1 // pred_region
      _
    $region5: #{tpu_custom_call.1} parent=1 // pred_fallthru
      _
    // Predicated region
    $region6: #{tpu_custom_call.1} parent=1 // pred_check
      _
    $region7: #{tpu_custom_call.1} parent=1 // pred_check_branch
      %16 = sbr.rel (0) target = $region9
    $region8: #{tpu_custom_call.1} parent=1 // pred_region
      _
    $region9: #{tpu_custom_call.1} parent=1 // pred_fallthru
      _
    // Predicated region
    $region10: #{tpu_custom_call.1} parent=1 // pred_check
      _
    $region11: #{tpu_custom_call.1} parent=1 // pred_check_branch
      %18 = sbr.rel (0) target = $region13
    $region12: #{tpu_custom_call.1} parent=1 // pred_region
      _
    $region13: #{tpu_custom_call.1} parent=1 // pred_fallthru
      _
    // Predicated region
    $region14: #{tpu_custom_call.1} parent=1 // pred_check
      _
    $region15: #{tpu_custom_call.1} parent=1 // pred_check_branch
      %20 = sbr.rel (0) target = $region17
    $region16: #{tpu_custom_call.1} parent=1 // pred_region
      _
    $region17: #{tpu_custom_call.1} parent=1 // pred_fallthru
      _
    // Predicated region
    $region18: #{tpu_custom_call.1} parent=1 // pred_check
      _
    $region19: #{tpu_custom_call.1} parent=1 // pred_check_branch
      %22 = sbr.rel (0) target = $region21
    $region20: #{tpu_custom_call.1} parent=1 // pred_region
      _
    $region21: #{tpu_custom_call.1} parent=1 // pred_fallthru
      _
    // Predicated region
    $region22: #{tpu_custom_call.1} parent=1 // pred_check
      _
    $region23: #{tpu_custom_call.1} parent=1 // pred_check_branch
      %24 = sbr.rel (0) target = $region25
    $region24: #{tpu_custom_call.1} parent=1 // pred_region
      _
    $region25: #{tpu_custom_call.1} parent=1 // pred_fallthru
      _
    // Predicated region
    $region26: #{tpu_custom_call.1} parent=1 // pred_check
      _
    $region27: #{tpu_custom_call.1} parent=1 // pred_check_branch
      %26 = sbr.rel (0) target = $region29
    $region28: #{tpu_custom_call.1} parent=1 // pred_region
      _
    $region29: #{tpu_custom_call.1} parent=1 // pred_fallthru
      _
    %v27 = vld [vmem:[%s0] sm:$0x3]
    %v28 = vlaneseq
    %v29 = vshrl.u32 %v28, 7
    %v30 = vadd.s32 %v29, 8
    %v31 = vadd.s32 %v29, 16
    %v32 = vadd.s32 %v29, 24
    %v33 = vadd.s32 %v29, 32
    %v34 = vadd.s32 %v29, 40
    %v35 = vadd.s32 %v29, 48
    %v36 = vadd.s32 %v29, 56
    %v38 = vunpack.c.l.s4 1966171168
    %v39 = vunpack.c.0.s8 %v38
    %v40 = vlaneseq
    %v41 = vshrl.u32 %v40, 7
    %v42 = vsub.s32 %v39, %v41
    %v43 = vrot.slane %v27, %v42
    %v44 = vcombine.high %v43, %v43
    %v46 = vunpack.c.l.s4 1966171168
    %v47 = vunpack.c.0.s8 %v46
    %v48 = vlaneseq
    %v49 = vshrl.u32 %v48, 7
    %v50 = vsub.s32 %v47, %v49
    %v51 = vrot.slane %v43, %v50
    %v53 = vunpack.c.l.s4 1966171168
    %v54 = vunpack.c.0.s8 %v53
    %v55 = vlaneseq
    %v56 = vshrl.u32 %v55, 7
    %v57 = vsub.s32 %v54, %v56
    %v58 = vrot.slane %v44, %v57
    %v59 = vlaneseq
    %v60 = vshrl.u32 %v59, 7
    %v61 = vsub.s32 0, %v60
    %v62 = vrot.slane %v51, %v61
    %v63 = vlaneseq
    %v64 = vshrl.u32 %v63, 7
    %v65 = vsub.s32 0, %v64
    %v66 = vrot.slane %v58, %v65
    %vm67 = vcmp.eq.s32.totalorder %v62, %v29
    %vm68 = vcmp.eq.s32.totalorder %v62, %v30
    %vm69 = vcmp.eq.s32.totalorder %v62, %v31
    %vm70 = vcmp.eq.s32.totalorder %v62, %v32
    %vm71 = vcmp.eq.s32.totalorder %v62, %v33
    %vm72 = vcmp.eq.s32.totalorder %v62, %v34
    %vm73 = vcmp.eq.s32.totalorder %v62, %v35
    %vm74 = vcmp.eq.s32.totalorder %v62, %v36
    %vm75 = vcmp.eq.s32.totalorder %v66, %v29
    %vm76 = vcmp.eq.s32.totalorder %v66, %v30
    %vm77 = vcmp.eq.s32.totalorder %v66, %v31
    %vm78 = vcmp.eq.s32.totalorder %v66, %v32
    %vm79 = vcmp.eq.s32.totalorder %v66, %v33
    %vm80 = vcmp.eq.s32.totalorder %v66, %v34
    %vm81 = vcmp.eq.s32.totalorder %v66, %v35
    %vm82 = vcmp.eq.s32.totalorder %v66, %v36
    %v83 = vsel %vm67, 1, 0
    %v84 = vsel %vm68, 1, 0
    %v85 = vsel %vm69, 1, 0
    %v86 = vsel %vm70, 1, 0
    %v87 = vsel %vm71, 1, 0
    %v88 = vsel %vm72, 1, 0
    %v89 = vsel %vm73, 1, 0
    %v90 = vsel %vm74, 1, 0
    %v91 = vsel %vm75, 1, 0
    %v92 = vsel %vm76, 1, 0
    %v93 = vsel %vm77, 1, 0
    %v94 = vsel %vm78, 1, 0
    %v95 = vsel %vm79, 1, 0
    %v96 = vsel %vm80, 1, 0
    %v97 = vsel %vm81, 1, 0
    %v98 = vsel %vm82, 1, 0
    %v99 = vcvt.s32.f32 %v83
    %v100 = vcvt.s32.f32 %v84
    %v101 = vcvt.s32.f32 %v85
    %v102 = vcvt.s32.f32 %v86
    %v103 = vcvt.s32.f32 %v87
    %v104 = vcvt.s32.f32 %v88
    %v105 = vcvt.s32.f32 %v89
    %v106 = vcvt.s32.f32 %v90
    %v107 = vcvt.s32.f32 %v91
    %v108 = vcvt.s32.f32 %v92
    %v109 = vcvt.s32.f32 %v93
    %v110 = vcvt.s32.f32 %v94
    %v111 = vcvt.s32.f32 %v95
    %v112 = vcvt.s32.f32 %v96
    %v113 = vcvt.s32.f32 %v97
    %v114 = vcvt.s32.f32 %v98
    %v115 = vld [vmem:[%s2] sm:$0x1]
    %v117 = vlaneseq
    %v118 = vshrl.u32 %v117, 7
    %v119 = vsub.s32 0, %v118
    %v120 = vrot.slane %v115, %v119
    %v122 = vmul.f32 %v99, %v120
    %v123 = vmul.f32 %v100, %v120
    %v124 = vmul.f32 %v101, %v120
    %v125 = vmul.f32 %v102, %v120
    %v126 = vmul.f32 %v103, %v120
    %v127 = vmul.f32 %v104, %v120
    %v128 = vmul.f32 %v105, %v120
    %v129 = vmul.f32 %v106, %v120
    %v130 = vmul.f32 %v107, %v120
    %v131 = vmul.f32 %v108, %v120
    %v132 = vmul.f32 %v109, %v120
    %v133 = vmul.f32 %v110, %v120
    %v134 = vmul.f32 %v111, %v120
    %v135 = vmul.f32 %v112, %v120
    %v136 = vmul.f32 %v113, %v120
    %v137 = vmul.f32 %v114, %v120
    %vm138 = vcmask 130048
    %v139 = vsel %vm138, %v122, 0.0
    %140 = vadd.xlane.f32.xlu0 %v139
    %v141 = vpop.xlane.xlu0 %140
    %v142 = vsel %vm138, %v123, 0.0
    %143 = vadd.xlane.f32.xlu0 %v142
    %v144 = vpop.xlane.xlu0 %143
    %v145 = vsel %vm138, %v124, 0.0
    %146 = vadd.xlane.f32.xlu0 %v145
    %v147 = vpop.xlane.xlu0 %146
    %v148 = vsel %vm138, %v125, 0.0
    %149 = vadd.xlane.f32.xlu0 %v148
    %v150 = vpop.xlane.xlu0 %149
    %v151 = vsel %vm138, %v126, 0.0
    %152 = vadd.xlane.f32.xlu0 %v151
    %v153 = vpop.xlane.xlu0 %152
    %v154 = vsel %vm138, %v127, 0.0
    %155 = vadd.xlane.f32.xlu0 %v154
    %v156 = vpop.xlane.xlu0 %155
    %v157 = vsel %vm138, %v128, 0.0
    %158 = vadd.xlane.f32.xlu0 %v157
    %v159 = vpop.xlane.xlu0 %158
    %v160 = vsel %vm138, %v129, 0.0
    %161 = vadd.xlane.f32.xlu0 %v160
    %v162 = vpop.xlane.xlu0 %161
    %v163 = vsel %vm138, %v130, 0.0
    %164 = vadd.xlane.f32.xlu0 %v163
    %v165 = vpop.xlane.xlu0 %164
    %v166 = vsel %vm138, %v131, 0.0
    %167 = vadd.xlane.f32.xlu0 %v166
    %v168 = vpop.xlane.xlu0 %167
    %v169 = vsel %vm138, %v132, 0.0
    %170 = vadd.xlane.f32.xlu0 %v169
    %v171 = vpop.xlane.xlu0 %170
    %v172 = vsel %vm138, %v133, 0.0
    %173 = vadd.xlane.f32.xlu0 %v172
    %v174 = vpop.xlane.xlu0 %173
    %v175 = vsel %vm138, %v134, 0.0
    %176 = vadd.xlane.f32.xlu0 %v175
    %v177 = vpop.xlane.xlu0 %176
    %v178 = vsel %vm138, %v135, 0.0
    %179 = vadd.xlane.f32.xlu0 %v178
    %v180 = vpop.xlane.xlu0 %179
    %v181 = vsel %vm138, %v136, 0.0
    %182 = vadd.xlane.f32.xlu0 %v181
    %v183 = vpop.xlane.xlu0 %182
    %v184 = vsel %vm138, %v137, 0.0
    %185 = vadd.xlane.f32.xlu0 %v184
    %v186 = vpop.xlane.xlu0 %185
    %v187 = vld [vmem:[%s1] sm:$0xff]
    %v188 = vld [vmem:[%s1 + $0x8] sm:$0xff]
    %v189 = vld [vmem:[%s1 + $0x10] sm:$0xff]
    %v190 = vld [vmem:[%s1 + $0x18] sm:$0xff]
    %v191 = vld [vmem:[%s1 + $0x20] sm:$0xff]
    %v192 = vld [vmem:[%s1 + $0x28] sm:$0xff]
    %v193 = vld [vmem:[%s1 + $0x30] sm:$0xff]
    %v194 = vld [vmem:[%s1 + $0x38] sm:$0xff]
    %v195 = vmul.f32 %v187, %v187
    %v196 = vmul.f32 %v188, %v188
    %v197 = vmul.f32 %v189, %v189
    %v198 = vmul.f32 %v190, %v190
    %v199 = vmul.f32 %v191, %v191
    %v200 = vmul.f32 %v192, %v192
    %v201 = vmul.f32 %v193, %v193
    %v202 = vmul.f32 %v194, %v194
    %vm203 = vcmask 261120
    %v204 = vsel %vm203, %v195, 0.0
    %205 = vadd.xlane.f32.xlu0 %v204
    %v206 = vpop.xlane.xlu0 %205
    %v207 = vsel %vm203, %v196, 0.0
    %208 = vadd.xlane.f32.xlu0 %v207
    %v209 = vpop.xlane.xlu0 %208
    %v210 = vsel %vm203, %v197, 0.0
    %211 = vadd.xlane.f32.xlu0 %v210
    %v212 = vpop.xlane.xlu0 %211
    %v213 = vsel %vm203, %v198, 0.0
    %214 = vadd.xlane.f32.xlu0 %v213
    %v215 = vpop.xlane.xlu0 %214
    %v216 = vsel %vm203, %v199, 0.0
    %217 = vadd.xlane.f32.xlu0 %v216
    %v218 = vpop.xlane.xlu0 %217
    %v219 = vsel %vm203, %v200, 0.0
    %220 = vadd.xlane.f32.xlu0 %v219
    %v221 = vpop.xlane.xlu0 %220
    %v222 = vsel %vm203, %v201, 0.0
    %223 = vadd.xlane.f32.xlu0 %v222
    %v224 = vpop.xlane.xlu0 %223
    %v225 = vsel %vm203, %v202, 0.0
    %226 = vadd.xlane.f32.xlu0 %v225
    %v227 = vpop.xlane.xlu0 %226
    %v228 = vrsqrt.pop %v206
    %v229 = vmul.f32 %v206, %v228
    %vm230 = vcmp.eq.f32.partialorder %v206, inf
    %v231 = vsel %vm230, %v206, %v229
    %vm232 = vcmp.eq.f32.partialorder %v206, 0.0
    %v233 = vand.u32 %v206, 2147483648
    %v234 = vsel %vm232, %v233, %v231
    %v235 = vrsqrt.pop %v209
    %v236 = vmul.f32 %v209, %v235
    %vm237 = vcmp.eq.f32.partialorder %v209, inf
    %v238 = vsel %vm237, %v209, %v236
    %vm239 = vcmp.eq.f32.partialorder %v209, 0.0
    %v240 = vand.u32 %v209, 2147483648
    %v241 = vsel %vm239, %v240, %v238
    %v242 = vrsqrt.pop %v212
    %v243 = vmul.f32 %v212, %v242
    %vm244 = vcmp.eq.f32.partialorder %v212, inf
    %v245 = vsel %vm244, %v212, %v243
    %vm246 = vcmp.eq.f32.partialorder %v212, 0.0
    %v247 = vand.u32 %v212, 2147483648
    %v248 = vsel %vm246, %v247, %v245
    %v249 = vrsqrt.pop %v215
    %v250 = vmul.f32 %v215, %v249
    %vm251 = vcmp.eq.f32.partialorder %v215, inf
    %v252 = vsel %vm251, %v215, %v250
    %vm253 = vcmp.eq.f32.partialorder %v215, 0.0
    %v254 = vand.u32 %v215, 2147483648
    %v255 = vsel %vm253, %v254, %v252
    %v256 = vrsqrt.pop %v218
    %v257 = vmul.f32 %v218, %v256
    %vm258 = vcmp.eq.f32.partialorder %v218, inf
    %v259 = vsel %vm258, %v218, %v257
    %vm260 = vcmp.eq.f32.partialorder %v218, 0.0
    %v261 = vand.u32 %v218, 2147483648
    %v262 = vsel %vm260, %v261, %v259
    %v263 = vrsqrt.pop %v221
    %v264 = vmul.f32 %v221, %v263
    %vm265 = vcmp.eq.f32.partialorder %v221, inf
    %v266 = vsel %vm265, %v221, %v264
    %vm267 = vcmp.eq.f32.partialorder %v221, 0.0
    %v268 = vand.u32 %v221, 2147483648
    %v269 = vsel %vm267, %v268, %v266
    %v270 = vrsqrt.pop %v224
    %v271 = vmul.f32 %v224, %v270
    %vm272 = vcmp.eq.f32.partialorder %v224, inf
    %v273 = vsel %vm272, %v224, %v271
    %vm274 = vcmp.eq.f32.partialorder %v224, 0.0
    %v275 = vand.u32 %v224, 2147483648
    %v276 = vsel %vm274, %v275, %v273
    %v277 = vrsqrt.pop %v227
    %v278 = vmul.f32 %v227, %v277
    %vm279 = vcmp.eq.f32.partialorder %v227, inf
    %v280 = vsel %vm279, %v227, %v278
    %vm281 = vcmp.eq.f32.partialorder %v227, 0.0
    %v282 = vand.u32 %v227, 2147483648
    %v283 = vsel %vm281, %v282, %v280
    %vm284 = vcmp.gt.f32.partialorder %v234, 1.0
    %vm285 = vcmp.gt.f32.partialorder %v241, 1.0
    %vm286 = vcmp.gt.f32.partialorder %v248, 1.0
    %vm287 = vcmp.gt.f32.partialorder %v255, 1.0
    %vm288 = vcmp.gt.f32.partialorder %v262, 1.0
    %vm289 = vcmp.gt.f32.partialorder %v269, 1.0
    %vm290 = vcmp.gt.f32.partialorder %v276, 1.0
    %vm291 = vcmp.gt.f32.partialorder %v283, 1.0
    %v292 = vmax.f32 %v234, 1e-07
    %v293 = vmax.f32 %v241, 1e-07
    %v294 = vmax.f32 %v248, 1e-07
    %v295 = vmax.f32 %v255, 1e-07
    %v296 = vmax.f32 %v262, 1e-07
    %v297 = vmax.f32 %v269, 1e-07
    %v298 = vmax.f32 %v276, 1e-07
    %v299 = vmax.f32 %v283, 1e-07
    %v300 = vrcp.pop %v292
    %v301 = vmul.f32 1.0, %v300
    %v302 = vrcp.pop %v293
    %v303 = vmul.f32 1.0, %v302
    %v304 = vrcp.pop %v294
    %v305 = vmul.f32 1.0, %v304
    %v306 = vrcp.pop %v295
    %v307 = vmul.f32 1.0, %v306
    %v308 = vrcp.pop %v296
    %v309 = vmul.f32 1.0, %v308
    %v310 = vrcp.pop %v297
    %v311 = vmul.f32 1.0, %v310
    %v312 = vrcp.pop %v298
    %v313 = vmul.f32 1.0, %v312
    %v314 = vrcp.pop %v299
    %v315 = vmul.f32 1.0, %v314
    %v316 = vsel %vm284, %v301, 1.0
    %v317 = vsel %vm285, %v303, 1.0
    %v318 = vsel %vm286, %v305, 1.0
    %v319 = vsel %vm287, %v307, 1.0
    %v320 = vsel %vm288, %v309, 1.0
    %v321 = vsel %vm289, %v311, 1.0
    %v322 = vsel %vm290, %v313, 1.0
    %v323 = vsel %vm291, %v315, 1.0
    %v324 = vmul.f32 %v187, %v316
    %v325 = vmul.f32 %v188, %v317
    %v326 = vmul.f32 %v189, %v318
    %v327 = vmul.f32 %v190, %v319
    %v328 = vmul.f32 %v191, %v320
    %v329 = vmul.f32 %v192, %v321
    %v330 = vmul.f32 %v193, %v322
    %v331 = vmul.f32 %v194, %v323
    %v348 = vlaneseq
    %v349 = vand.u32 %v348, 127
    %v350 = vlaneseq
    %v351 = vshrl.u32 %v350, 7
    %v352 = vsub.s32 %v349, %v351
    %v353 = vrot.slane %v141, %v352
    %v354 = vadd.s32 %v349, 4294967288
    %v355 = vlaneseq
    %v356 = vshrl.u32 %v355, 7
    %v357 = vsub.s32 %v354, %v356
    %v358 = vrot.slane %v144, %v357
    %vm359 = vcmask 130112
    %v360 = vsel %vm359, %v358, %v353
    %v361 = vadd.s32 %v349, 4294967280
    %v362 = vlaneseq
    %v363 = vshrl.u32 %v362, 7
    %v364 = vsub.s32 %v361, %v363
    %v365 = vrot.slane %v147, %v364
    %vm366 = vcmask 195712
    %v367 = vsel %vm366, %v365, %v360
    %v368 = vadd.s32 %v349, 4294967272
    %v369 = vlaneseq
    %v370 = vshrl.u32 %v369, 7
    %v371 = vsub.s32 %v368, %v370
    %v372 = vrot.slane %v150, %v371
    %vm373 = vcmask 261312
    %v374 = vsel %vm373, %v372, %v367
    %v375 = vadd.s32 %v349, 4294967264
    %v376 = vlaneseq
    %v377 = vshrl.u32 %v376, 7
    %v378 = vsub.s32 %v375, %v377
    %v379 = vrot.slane %v153, %v378
    %vm380 = vcmask 326912
    %v381 = vsel %vm380, %v379, %v374
    %v382 = vadd.s32 %v349, 4294967256
    %v383 = vlaneseq
    %v384 = vshrl.u32 %v383, 7
    %v385 = vsub.s32 %v382, %v384
    %v386 = vrot.slane %v156, %v385
    %vm387 = vcmask 392512
    %v388 = vsel %vm387, %v386, %v381
    %v389 = vadd.s32 %v349, 4294967248
    %v390 = vlaneseq
    %v391 = vshrl.u32 %v390, 7
    %v392 = vsub.s32 %v389, %v391
    %v393 = vrot.slane %v159, %v392
    %vm394 = vcmask 458112
    %v395 = vsel %vm394, %v393, %v388
    %v396 = vadd.s32 %v349, 4294967240
    %v397 = vlaneseq
    %v398 = vshrl.u32 %v397, 7
    %v399 = vsub.s32 %v396, %v398
    %v400 = vrot.slane %v162, %v399
    %vm401 = vcmask 523712
    %v402 = vsel %vm401, %v400, %v395
    %v403 = vlaneseq
    %v404 = vshrl.u32 %v403, 7
    %v405 = vsub.s32 %v349, %v404
    %v406 = vrot.slane %v165, %v405
    %v407 = vlaneseq
    %v408 = vshrl.u32 %v407, 7
    %v409 = vsub.s32 %v354, %v408
    %v410 = vrot.slane %v168, %v409
    %v411 = vsel %vm359, %v410, %v406
    %v412 = vlaneseq
    %v413 = vshrl.u32 %v412, 7
    %v414 = vsub.s32 %v361, %v413
    %v415 = vrot.slane %v171, %v414
    %v416 = vsel %vm366, %v415, %v411
    %v417 = vlaneseq
    %v418 = vshrl.u32 %v417, 7
    %v419 = vsub.s32 %v368, %v418
    %v420 = vrot.slane %v174, %v419
    %v421 = vsel %vm373, %v420, %v416
    %v422 = vlaneseq
    %v423 = vshrl.u32 %v422, 7
    %v424 = vsub.s32 %v375, %v423
    %v425 = vrot.slane %v177, %v424
    %v426 = vsel %vm380, %v425, %v421
    %v427 = vlaneseq
    %v428 = vshrl.u32 %v427, 7
    %v429 = vsub.s32 %v382, %v428
    %v430 = vrot.slane %v180, %v429
    %v431 = vsel %vm387, %v430, %v426
    %v432 = vlaneseq
    %v433 = vshrl.u32 %v432, 7
    %v434 = vsub.s32 %v389, %v433
    %v435 = vrot.slane %v183, %v434
    %v436 = vsel %vm394, %v435, %v431
    %v437 = vlaneseq
    %v438 = vshrl.u32 %v437, 7
    %v439 = vsub.s32 %v396, %v438
    %v440 = vrot.slane %v186, %v439
    %v441 = vsel %vm401, %v440, %v436
    %vm442 = vcmask 1041409
    %v443 = vsel %vm442, %v441, %v402
    %vm444 = vcmask 523264
    %v445 = vsel %vm444, %v443, 0
    %447 = vmatprep.subr.mxu0 0.0
    %448 = vmatpush1.msra.mxu0 0.0
    %449 = vmatprep.subr.mxu0 0.0
    %450 = vmatpush1.msra.mxu0 0.0
    %451 = vmatprep.subr.mxu0 0.0
    %452 = vmatpush1.msra.mxu0 0.0
    %453 = vmatprep.subr.mxu0 0.0
    %454 = vmatpush1.msra.mxu0 0.0
    %455 = vmatprep.subr.mxu0 0.0
    %456 = vmatpush1.msra.mxu0 0.0
    %457 = vmatprep.subr.mxu0 0.0
    %458 = vmatpush1.msra.mxu0 0.0
    %459 = vmatprep.subr.mxu0 0.0
    %460 = vmatpush1.msra.mxu0 0.0
    %461 = vmatprep.subr.mxu0 0.0
    %462 = vmatpush1.msra.mxu0 0.0
    %463 = vmatprep.subr.mxu0 0.0
    %464 = vmatpush1.msra.mxu0 %v331
    %465 = vmatprep.subr.mxu0 0.0
    %466 = vmatpush1.msra.mxu0 %v330
    %467 = vmatprep.subr.mxu0 0.0
    %468 = vmatpush1.msra.mxu0 %v329
    %469 = vmatprep.subr.mxu0 0.0
    %470 = vmatpush1.msra.mxu0 %v328
    %471 = vmatprep.subr.mxu0 0.0
    %472 = vmatpush1.msra.mxu0 %v327
    %473 = vmatprep.subr.mxu0 0.0
    %474 = vmatpush1.msra.mxu0 %v326
    %475 = vmatprep.subr.mxu0 0.0
    %476 = vmatpush1.msra.mxu0 %v325
    %477 = vmatprep.subr.mxu0 0.0
    %478 = vmatpush1.msra.mxu0 %v324
    %479 = vmatprep.subr.mxu0 0.0
    %480 = vmatpush2.msra.mxu0 0.0
    %481 = vmatprep.subr.mxu0 0.0
    %482 = vmatpush2.msra.mxu0 0.0
    %483 = vmatprep.subr.mxu0 0.0
    %484 = vmatpush2.msra.mxu0 0.0
    %485 = vmatprep.subr.mxu0 0.0
    %486 = vmatpush2.msra.mxu0 0.0
    %487 = vmatprep.subr.mxu0 0.0
    %488 = vmatpush2.msra.mxu0 0.0
    %489 = vmatprep.subr.mxu0 0.0
    %490 = vmatpush2.msra.mxu0 0.0
    %491 = vmatprep.subr.mxu0 0.0
    %492 = vmatpush2.msra.mxu0 0.0
    %493 = vmatprep.subr.mxu0 0.0
    %494 = vmatpush2.msra.mxu0 0.0
    %495 = vmatprep.subr.mxu0 0.0
    %496 = vmatpush2.msra.mxu0 0.0
    %497 = vmatprep.subr.mxu0 0.0
    %498 = vmatpush2.msra.mxu0 0.0
    %499 = vmatprep.subr.mxu0 0.0
    %500 = vmatpush2.msra.mxu0 0.0
    %501 = vmatprep.subr.mxu0 0.0
    %502 = vmatpush2.msra.mxu0 0.0
    %503 = vmatprep.subr.mxu0 0.0
    %504 = vmatpush2.msra.mxu0 0.0
    %505 = vmatprep.subr.mxu0 0.0
    %506 = vmatpush2.msra.mxu0 0.0
    %507 = vmatprep.subr.mxu0 0.0
    %508 = vmatpush2.msra.mxu0 0.0
    %509 = vmatprep.subr.mxu0 0.0
    %510 = vmatpush2.msra.mxu0 0.0
    %511 = vmatprep.mubr.f32.mxu0 0.0
    %512 = vmatmul.mubr.f32.gmra.mxu0 %v445
    %v513 = vpop.f32.mrf.mxu0
    %v514 = vadd.f32 0.0, %v513
    %v515 = vpop.f32.mrf.mxu0
    %516 = vdwg.mxu0
    %v517 = vmul.f32 %v514, %v514
    %vm518 = vcmask 254976
    %v519 = vsel %vm518, %v517, 0.0
    %520 = vadd.xlane.f32.xlu0 %v519
    %v521 = vpop.xlane.xlu0 %520
    %v522 = vrsqrt.pop %v521
    %v523 = vmul.f32 %v521, %v522
    %vm524 = vcmp.eq.f32.partialorder %v521, inf
    %v525 = vsel %vm524, %v521, %v523
    %vm526 = vcmp.eq.f32.partialorder %v521, 0.0
    %v527 = vand.u32 %v521, 2147483648
    %v528 = vsel %vm526, %v527, %v525
    %v529 = vmax.f32 %v528, 1e-12
    %v530 = vrcp.pop %v529
    %v531 = vmul.f32 %v514, %v530
    %v532 = vld [vmem:[%s3] sm:$0xff]
    %v533 = vld [vmem:[%s3 + $0x8] sm:$0xff]
    %v534 = vld [vmem:[%s3 + $0x10] sm:$0xff]
    %v535 = vld [vmem:[%s3 + $0x18] sm:$0xff]
    %v536 = vld [vmem:[%s4] sm:$0x1]
    %v538 = vlaneseq
    %v539 = vshrl.u32 %v538, 7
    %v540 = vsub.s32 0, %v539
    %v541 = vrot.slane %v536, %v540
    %v544 = vsel %vm203, %v531, 0
    %546 = vmatprep.subr.mxu0 0.0
    %547 = vmatpush1.msra.mxu0 0.0
    %548 = vmatprep.subr.mxu0 0.0
    %549 = vmatpush1.msra.mxu0 0.0
    %550 = vmatprep.subr.mxu0 0.0
    %551 = vmatpush1.msra.mxu0 0.0
    %552 = vmatprep.subr.mxu0 0.0
    %553 = vmatpush1.msra.mxu0 0.0
    %554 = vmatprep.subr.mxu0 0.0
    %555 = vmatpush1.msra.mxu0 0.0
    %556 = vmatprep.subr.mxu0 0.0
    %557 = vmatpush1.msra.mxu0 0.0
    %558 = vmatprep.subr.mxu0 0.0
    %559 = vmatpush1.msra.mxu0 0.0
    %560 = vmatprep.subr.mxu0 0.0
    %561 = vmatpush1.msra.mxu0 0.0
    %562 = vmatprep.subr.mxu0 0.0
    %563 = vmatpush1.msra.mxu0 0.0
    %564 = vmatprep.subr.mxu0 0.0
    %565 = vmatpush1.msra.mxu0 0.0
    %566 = vmatprep.subr.mxu0 0.0
    %567 = vmatpush1.msra.mxu0 0.0
    %568 = vmatprep.subr.mxu0 0.0
    %569 = vmatpush1.msra.mxu0 0.0
    %570 = vmatprep.subr.mxu0 0.0
    %571 = vmatpush1.msra.mxu0 %v535
    %572 = vmatprep.subr.mxu0 0.0
    %573 = vmatpush1.msra.mxu0 %v534
    %574 = vmatprep.subr.mxu0 0.0
    %575 = vmatpush1.msra.mxu0 %v533
    %576 = vmatprep.subr.mxu0 0.0
    %577 = vmatpush1.msra.mxu0 %v532
    %578 = vmatprep.subr.mxu0 0.0
    %579 = vmatpush2.msra.mxu0 0.0
    %580 = vmatprep.subr.mxu0 0.0
    %581 = vmatpush2.msra.mxu0 0.0
    %582 = vmatprep.subr.mxu0 0.0
    %583 = vmatpush2.msra.mxu0 0.0
    %584 = vmatprep.subr.mxu0 0.0
    %585 = vmatpush2.msra.mxu0 0.0
    %586 = vmatprep.subr.mxu0 0.0
    %587 = vmatpush2.msra.mxu0 0.0
    %588 = vmatprep.subr.mxu0 0.0
    %589 = vmatpush2.msra.mxu0 0.0
    %590 = vmatprep.subr.mxu0 0.0
    %591 = vmatpush2.msra.mxu0 0.0
    %592 = vmatprep.subr.mxu0 0.0
    %593 = vmatpush2.msra.mxu0 0.0
    %594 = vmatprep.subr.mxu0 0.0
    %595 = vmatpush2.msra.mxu0 0.0
    %596 = vmatprep.subr.mxu0 0.0
    %597 = vmatpush2.msra.mxu0 0.0
    %598 = vmatprep.subr.mxu0 0.0
    %599 = vmatpush2.msra.mxu0 0.0
    %600 = vmatprep.subr.mxu0 0.0
    %601 = vmatpush2.msra.mxu0 0.0
    %602 = vmatprep.subr.mxu0 0.0
    %603 = vmatpush2.msra.mxu0 0.0
    %604 = vmatprep.subr.mxu0 0.0
    %605 = vmatpush2.msra.mxu0 0.0
    %606 = vmatprep.subr.mxu0 0.0
    %607 = vmatpush2.msra.mxu0 0.0
    %608 = vmatprep.subr.mxu0 0.0
    %609 = vmatpush2.msra.mxu0 0.0
    %610 = vmatprep.mubr.f32.mxu0 0.0
    %611 = vmatmul.mubr.f32.gmra.mxu0 %v544
    %v612 = vpop.f32.mrf.mxu0
    %v613 = vadd.f32 %v541, %v612
    %v614 = vpop.f32.mrf.mxu0
    %615 = vdwg.mxu0
    %v616 = vtanh.pop %v613
    %v617 = vld [vmem:[%s5] sm:$0xff]
    %v618 = vld [vmem:[%s5 + $0x8] sm:$0xff]
    %v619 = vld [vmem:[%s5 + $0x10] sm:$0xff]
    %v620 = vld [vmem:[%s5 + $0x18] sm:$0xff]
    %v621 = vld [vmem:[%s6] sm:$0x1]
    %v623 = vlaneseq
    %v624 = vshrl.u32 %v623, 7
    %v625 = vsub.s32 0, %v624
    %v626 = vrot.slane %v621, %v625
    %v629 = vsel %vm203, %v616, 0
    %631 = vmatprep.subr.mxu0 0.0
    %632 = vmatpush1.msra.mxu0 0.0
    %633 = vmatprep.subr.mxu0 0.0
    %634 = vmatpush1.msra.mxu0 0.0
    %635 = vmatprep.subr.mxu0 0.0
    %636 = vmatpush1.msra.mxu0 0.0
    %637 = vmatprep.subr.mxu0 0.0
    %638 = vmatpush1.msra.mxu0 0.0
    %639 = vmatprep.subr.mxu0 0.0
    %640 = vmatpush1.msra.mxu0 0.0
    %641 = vmatprep.subr.mxu0 0.0
    %642 = vmatpush1.msra.mxu0 0.0
    %643 = vmatprep.subr.mxu0 0.0
    %644 = vmatpush1.msra.mxu0 0.0
    %645 = vmatprep.subr.mxu0 0.0
    %646 = vmatpush1.msra.mxu0 0.0
    %647 = vmatprep.subr.mxu0 0.0
    %648 = vmatpush1.msra.mxu0 0.0
    %649 = vmatprep.subr.mxu0 0.0
    %650 = vmatpush1.msra.mxu0 0.0
    %651 = vmatprep.subr.mxu0 0.0
    %652 = vmatpush1.msra.mxu0 0.0
    %653 = vmatprep.subr.mxu0 0.0
    %654 = vmatpush1.msra.mxu0 0.0
    %655 = vmatprep.subr.mxu0 0.0
    %656 = vmatpush1.msra.mxu0 %v620
    %657 = vmatprep.subr.mxu0 0.0
    %658 = vmatpush1.msra.mxu0 %v619
    %659 = vmatprep.subr.mxu0 0.0
    %660 = vmatpush1.msra.mxu0 %v618
    %661 = vmatprep.subr.mxu0 0.0
    %662 = vmatpush1.msra.mxu0 %v617
    %663 = vmatprep.subr.mxu0 0.0
    %664 = vmatpush2.msra.mxu0 0.0
    %665 = vmatprep.subr.mxu0 0.0
    %666 = vmatpush2.msra.mxu0 0.0
    %667 = vmatprep.subr.mxu0 0.0
    %668 = vmatpush2.msra.mxu0 0.0
    %669 = vmatprep.subr.mxu0 0.0
    %670 = vmatpush2.msra.mxu0 0.0
    %671 = vmatprep.subr.mxu0 0.0
    %672 = vmatpush2.msra.mxu0 0.0
    %673 = vmatprep.subr.mxu0 0.0
    %674 = vmatpush2.msra.mxu0 0.0
    %675 = vmatprep.subr.mxu0 0.0
    %676 = vmatpush2.msra.mxu0 0.0
    %677 = vmatprep.subr.mxu0 0.0
    %678 = vmatpush2.msra.mxu0 0.0
    %679 = vmatprep.subr.mxu0 0.0
    %680 = vmatpush2.msra.mxu0 0.0
    %681 = vmatprep.subr.mxu0 0.0
    %682 = vmatpush2.msra.mxu0 0.0
    %683 = vmatprep.subr.mxu0 0.0
    %684 = vmatpush2.msra.mxu0 0.0
    %685 = vmatprep.subr.mxu0 0.0
    %686 = vmatpush2.msra.mxu0 0.0
    %687 = vmatprep.subr.mxu0 0.0
    %688 = vmatpush2.msra.mxu0 0.0
    %689 = vmatprep.subr.mxu0 0.0
    %690 = vmatpush2.msra.mxu0 0.0
    %691 = vmatprep.subr.mxu0 0.0
    %692 = vmatpush2.msra.mxu0 0.0
    %693 = vmatprep.subr.mxu0 0.0
    %694 = vmatpush2.msra.mxu0 0.0
    %695 = vmatprep.mubr.f32.mxu0 0.0
    %696 = vmatmul.mubr.f32.gmra.mxu0 %v629
    %v697 = vpop.f32.mrf.mxu0
    %v698 = vadd.f32 %v626, %v697
    %v699 = vpop.f32.mrf.mxu0
    %700 = vdwg.mxu0
    %v701 = vtanh.pop %v698
    %702 = vst.msk [vmem:[#allocation2] sm:$0x3] %vm518, %v701
    // Predicated region
    $region30: #{tpu_custom_call.1} parent=1 // pred_check
      _
    $region31: #{tpu_custom_call.1} parent=1 // pred_check_branch
      %704 = sbr.rel (0) target = $region33
    $region32: #{tpu_custom_call.1} parent=1 // pred_region
      %s706 = ssub.s32 32, 32
      %707 = vsyncadd [#allocation3], %s706
      %s709 = sshll.u32 [#allocation2], 4
      %s710 = int_to_ptr.vmem [resolvable:$true] %s709
      %712 = dma.vmem_to_hbm [thread:$0]  %s710, 32, %s7, [#allocation3]
    $region33: #{tpu_custom_call.1} parent=1 // pred_fallthru
      _
    // Predicated region
    $region34: #{tpu_custom_call.1} parent=1 // pred_check
      _
    $region35: #{tpu_custom_call.1} parent=1 // pred_check_branch
      %714 = sbr.rel (0) target = $region37
    $region36: #{tpu_custom_call.1} parent=1 // pred_region
      %715 = dma.done [#allocation3], 32
    $region37: #{tpu_custom_call.1} parent=1 // pred_fallthru
      _
    %716 = vsyncpa [#allocation3], 1

</llo_original>
